<compile_context>
chip_gen: v7x
topology: tpu7x:2x2x1
jax: 0.10.0
libtpu: 0.0.40
codegen_flags: <defaults>
</compile_context>

<pallas_src>
import jax
import jax.numpy as jnp
import numpy as np
from jax.experimental import pallas as pl
from jax.experimental.pallas import tpu as pltpu


def _lstm2_wavefront_kernel(x_ref, wproj_ref, bbig_ref, wbig_ref, out_ref):
    """Fused, skewed 2-layer LSTM in one kernel invocation (no grid).

    x_ref:     ((T+1)*Bp, D)  input sequence, time-major, flattened; the last
                              Bp rows are zeros (epilogue wavefront step).
    wproj_ref: (D, 8H)        interleaved input-projection weight
                              [i0 i1 f0 f1 g0 g1 o0 o1]; layer-1 columns zero;
                              sigmoid-gate columns pre-scaled by 0.5.
    bbig_ref:  (1, 8H)        interleaved combined biases (b0 and b1), same
                              pre-scaling.
    wbig_ref:  (2H, 8H)       fused recurrent weight: top H rows multiply h0
                              ([W_hh0^T | W_ih1^T] interleaved), bottom H rows
                              multiply h1 ([0 | W_hh1^T]); same pre-scaling.
    out_ref:   (Bp, 4H)       packed final states [h0 | h1 | c0 | c1].
    """
    Bp = out_ref.shape[0]
    T = x_ref.shape[0] // Bp - 1
    H2 = wbig_ref.shape[0]            # 2H (packed two-layer state width)
    H = H2 // 2
    G = wbig_ref.shape[1]             # 8H (packed two-layer gate width)

    # ---- Hoisted input projection for all timesteps (+ one zero timestep for
    # the epilogue). One matmul; biases for BOTH layers folded in; already in
    # the interleaved fused-gate layout, so proj_all[k] is exactly the
    # per-iteration additive term.
    proj_all = jnp.dot(x_ref[...], wproj_ref[...],
                       preferred_element_type=jnp.float32) + bbig_ref[...]

    wbig = wbig_ref[...]

    # Hoisted lane masks (computed once, outside the recurrence).
    lane = jax.lax.broadcasted_iota(jnp.int32, (Bp, G), dimension=1)
    is_g = jnp.logical_and(lane >= 2 * H2, lane < 3 * H2)   # tanh-gate lanes
    is_l0 = (lane % H2) < H                                  # layer-0 lanes

    def cell_update(gates, c01):
        # Sigmoid-gate columns were pre-scaled by 0.5 in the packed weights,
        # so a single full-tile tanh yields tanh(g) on g lanes and tanh(x/2)
        # on the sigmoid lanes; sigmoid(x) = 0.5*tanh(x/2) + 0.5.
        th = jnp.tanh(gates)
        acts = jnp.where(is_g, th, 0.5 * th + 0.5)
        i01 = acts[:, 0 * H2:1 * H2]
        f01 = acts[:, 1 * H2:2 * H2]
        g01 = acts[:, 2 * H2:3 * H2]
        o01 = acts[:, 3 * H2:4 * H2]
        c01n = f01 * c01 + i01 * g01
        h01n = o01 * jnp.tanh(c01n)
        return h01n, c01n

    # ---- Prologue (wavefront step 0): layer-0 timestep 0 only. Zeroing the
    # layer-1 gate lanes makes that packed half come out exactly zero
    # (g = tanh(0) = 0  =>  c = 0, h = sigmoid(0)*tanh(0) = 0), so no separate
    # code path is needed.
    gates = jnp.where(is_l0, proj_all[0:Bp], 0.0)
    h01, c01 = cell_update(gates, jnp.zeros((Bp, H2), jnp.float32))

    # ---- Main wavefront iterations k = 1..T-1: ONE fused matmul per
    # iteration computes layer-0 timestep k and layer-1 timestep k-1 from the
    # packed carry [h0_{k-1} | h1_{k-2}].
    # TODO(synk): for large T, cap the unroll / chunk the hoisted projection
    # over time to bound code size and VMEM (fine at T=8).
    for k in range(1, T):
        gates = (jnp.dot(h01, wbig, preferred_element_type=jnp.float32)
                 + proj_all[k * Bp:(k + 1) * Bp])
        h01, c01 = cell_update(gates, c01)

    # ---- Epilogue (wavefront step T): layer-1 timestep T-1. proj_all[T] is
    # just the folded biases (zero input row); the layer-0 half of this last
    # update is discarded.
    h0_last = h01[:, :H]
    c0_last = c01[:, :H]
    gates = (jnp.dot(h01, wbig, preferred_element_type=jnp.float32)
             + proj_all[T * Bp:(T + 1) * Bp])
    h01e, c01e = cell_update(gates, c01)

    # Single lane-dense (Bp, 4H) output: [h0 | h1 | c0 | c1].
    out_ref[...] = jnp.concatenate(
        [h0_last, h01e[:, H:], c0_last, c01e[:, H:]], axis=1)


def pack_encoder_params(raw):
    """Pack raw PyTorch-layout LSTM weights into the fused kernel layout.

    Gate columns are interleaved per gate block as [i0 i1 f0 f1 g0 g1 o0 o1],
    and the i/f/o (sigmoid) columns are pre-scaled by 0.5 so the kernel can
    evaluate sigmoid via a single tanh.
    """
    wih0, whh0 = raw["wih0"], raw["whh0"]
    wih1, whh1 = raw["wih1"], raw["whh1"]
    H = whh0.shape[1]
    D = wih0.shape[1]

    def il(a0, a1):  # interleave (rows,4H) x (rows,4H) -> (rows,8H)
        return jnp.concatenate(
            [jnp.concatenate([a0[:, g * H:(g + 1) * H],
                              a1[:, g * H:(g + 1) * H]], axis=1)
             for g in range(4)], axis=1)

    b0 = (raw["bih0"] + raw["bhh0"])[None, :]
    b1 = (raw["bih1"] + raw["bhh1"])[None, :]

    w_proj = il(wih0.T, jnp.zeros((D, 4 * H), jnp.float32))          # (D, 8H)
    b_big = il(b0, b1)                                               # (1, 8H)
    w_top = il(whh0.T, wih1.T)                                       # (H, 8H)
    w_bot = il(jnp.zeros((H, 4 * H), jnp.float32), whh1.T)           # (H, 8H)
    w_big = jnp.concatenate([w_top, w_bot], axis=0)                  # (2H, 8H)

    # Pre-fold the 0.5 of sigmoid(x) = 0.5*tanh(0.5*x) + 0.5 into the i/f/o
    # gate columns (all columns except the g block, lanes [4H, 6H)).
    lane = jnp.arange(8 * H)
    is_g_col = jnp.logical_and(lane >= 4 * H, lane < 6 * H)
    col_scale = jnp.where(is_g_col, 1.0, 0.5).astype(jnp.float32)[None, :]

    return {"w_proj": w_proj * col_scale,
            "b_big": b_big * col_scale,
            "w_big": w_big * col_scale}


def encoder_forward(inputs, params):
    """Equivalent of Encoder.forward(inputs) with self.hidden == None.

    inputs: (T, B, D) float32, seq-major (PyTorch nn.LSTM default layout).
    returns: (h_n, c_n), each (num_layers=2, B, H) float32.
    """
    T, B, D = inputs.shape
    H = params["w_big"].shape[0] // 2

    # Pad batch to a multiple of 8 (full-sublane tiles) and append one zero
    # timestep for the wavefront epilogue; pass pre-flattened so no in-kernel
    # relayout precedes the hoisted projection matmul.
    Bp = ((B + 7) // 8) * 8
    x_pad = jnp.zeros((T + 1, Bp, D), jnp.float32).at[:T, :B, :].set(inputs)
    x_flat = x_pad.reshape((T + 1) * Bp, D)

    vmem = pltpu.MemorySpace.VMEM
    out = pl.pallas_call(
        _lstm2_wavefront_kernel,
        out_shape=jax.ShapeDtypeStruct((Bp, 4 * H), jnp.float32),
        in_specs=[pl.BlockSpec(memory_space=vmem)] * 4,
        out_specs=pl.BlockSpec(memory_space=vmem),
    )(x_flat, params["w_proj"], params["b_big"], params["w_big"])

    h_n = jnp.stack([out[:B, 0 * H:1 * H], out[:B, 1 * H:2 * H]])
    c_n = jnp.stack([out[:B, 2 * H:3 * H], out[:B, 3 * H:4 * H]])
    return h_n, c_n


def init_encoder_params(key, input_size, hidden_dim):
    """Deterministic params matching nn.LSTM(input_size, hidden_dim,
    num_layers=2) shapes. PyTorch init is U(-1/sqrt(H), 1/sqrt(H)); gate
    order (i, f, g, o). Returns (packed kernel params, raw params)."""
    H = hidden_dim
    bound = 1.0 / float(np.sqrt(H))
    ks = jax.random.split(key, 8)

    def u(k, shape):
        return jax.random.uniform(k, shape, jnp.float32, -bound, bound)

    raw = {
        "wih0": u(ks[0], (4 * H, input_size)),   # weight_ih_l0
        "whh0": u(ks[1], (4 * H, H)),            # weight_hh_l0
        "bih0": u(ks[2], (4 * H,)),              # bias_ih_l0
        "bhh0": u(ks[3], (4 * H,)),              # bias_hh_l0
        "wih1": u(ks[4], (4 * H, H)),            # weight_ih_l1
        "whh1": u(ks[5], (4 * H, H)),            # weight_hh_l1
        "bih1": u(ks[6], (4 * H,)),              # bias_ih_l1
        "bhh1": u(ks[7], (4 * H,)),              # bias_hh_l1
    }
    return pack_encoder_params(raw), raw


def _encoder_reference(inputs, raw):
    """Pure-JAX reference (same math as nn.LSTM, no Pallas)."""
    T, B, _ = inputs.shape
    H = raw["whh0"].shape[1]

    def cell(x, h, c, wih, whh, bih, bhh):
        gates = x @ wih.T + h @ whh.T + bih + bhh
        i = jax.nn.sigmoid(gates[:, 0 * H:1 * H])
        f = jax.nn.sigmoid(gates[:, 1 * H:2 * H])
        g = jnp.tanh(gates[:, 2 * H:3 * H])
        o = jax.nn.sigmoid(gates[:, 3 * H:4 * H])
        c_new = f * c + i * g
        return o * jnp.tanh(c_new), c_new

    h0 = c0 = h1 = c1 = jnp.zeros((B, H), jnp.float32)
    for t in range(T):
        h0, c0 = cell(inputs[t], h0, c0,
                      raw["wih0"], raw["whh0"], raw["bih0"], raw["bhh0"])
        h1, c1 = cell(h0, h1, c1,
                      raw["wih1"], raw["whh1"], raw["bih1"], raw["bhh1"])
    return jnp.stack([h0, h1]), jnp.stack([c0, c1])


if __name__ == "__main__":
    # Small shapes implied by the module: seq=8, batch=2, input_size=16, hidden=32.
    T, B, D, H = 8, 2, 16, 32

    key = jax.random.PRNGKey(0)
    k_params, k_x = jax.random.split(key)
    params, raw = init_encoder_params(k_params, D, H)
    inputs = jax.random.normal(k_x, (T, B, D), dtype=jnp.float32)

    h_n, c_n = encoder_forward(inputs, params)
    jax.block_until_ready((h_n, c_n))

    assert h_n.shape == (2, B, H) and c_n.shape == (2, B, H)

    h_ref, c_ref = _encoder_reference(inputs, raw)
    np.testing.assert_allclose(np.asarray(h_n), np.asarray(h_ref),
                               rtol=5e-5, atol=5e-5)
    np.testing.assert_allclose(np.asarray(c_n), np.asarray(c_ref),
                               rtol=5e-5, atol=5e-5)

    print("KERNEL_OK")
</pallas_src>

<mosaic_0001>
module attributes {stable_mosaic.version = 11 : i64} {
  func.func @_lstm2_wavefront_kernel(%arg0: memref<72x16xf32, #tpu.memory_space<vmem>>, %arg1: memref<16x256xf32, #tpu.memory_space<vmem>>, %arg2: memref<1x256xf32, #tpu.memory_space<vmem>>, %arg3: memref<64x256xf32, #tpu.memory_space<vmem>>, %arg4: memref<8x128xf32, #tpu.memory_space<vmem>>) attributes {dimension_semantics = [], scalar_prefetch = 0 : i64, scratch_operands = 0 : i64, tpu.core_type = #tpu.core_type<tc>} {
    %c0 = arith.constant 0 : index
    %c0_0 = arith.constant 0 : index
    %0 = vector.load %arg0[%c0, %c0_0] : memref<72x16xf32, #tpu.memory_space<vmem>>, vector<72x16xf32>
    %c0_1 = arith.constant 0 : index
    %c0_2 = arith.constant 0 : index
    %1 = vector.load %arg1[%c0_1, %c0_2] : memref<16x256xf32, #tpu.memory_space<vmem>>, vector<16x256xf32>
    %cst = arith.constant dense<0.000000e+00> : vector<72x256xf32>
    %2 = tpu.matmul %0, %1, %cst {dimension_numbers = #tpu.dot_dimension_numbers<[1], [0], [0], [1], [0, 0, 1, 1], [], []>} : vector<72x16xf32>, vector<16x256xf32>, vector<72x256xf32> -> vector<72x256xf32>
    %c0_3 = arith.constant 0 : index
    %c0_4 = arith.constant 0 : index
    %3 = vector.load %arg2[%c0_3, %c0_4] : memref<1x256xf32, #tpu.memory_space<vmem>>, vector<1x256xf32>
    %4 = vector.broadcast %3 : vector<1x256xf32> to vector<72x256xf32>
    %5 = arith.addf %2, %4 : vector<72x256xf32>
    %c0_5 = arith.constant 0 : index
    %c0_6 = arith.constant 0 : index
    %6 = vector.load %arg3[%c0_5, %c0_6] : memref<64x256xf32, #tpu.memory_space<vmem>>, vector<64x256xf32>
    %7 = tpu.iota {dimensions = array<i32: 1>} : vector<8x256xi32>
    %c128_i32 = arith.constant 128 : i32
    %8 = vector.broadcast %c128_i32 : i32 to vector<8x256xi32>
    %9 = arith.cmpi sge, %7, %8 : vector<8x256xi32>
    %c192_i32 = arith.constant 192 : i32
    %10 = vector.broadcast %c192_i32 : i32 to vector<8x256xi32>
    %11 = arith.cmpi slt, %7, %10 : vector<8x256xi32>
    %12 = arith.andi %9, %11 : vector<8x256xi1>
    %c64_i32 = arith.constant 64 : i32
    %c0_i32 = arith.constant 0 : i32
    %13 = arith.cmpi eq, %c64_i32, %c0_i32 : i32
    %c1_i32 = arith.constant 1 : i32
    %14 = arith.select %13, %c1_i32, %c64_i32 : i32
    %15 = vector.broadcast %14 : i32 to vector<8x256xi32>
    %16 = arith.remsi %7, %15 : vector<8x256xi32>
    %c0_i32_7 = arith.constant 0 : i32
    %17 = vector.broadcast %c0_i32_7 : i32 to vector<8x256xi32>
    %18 = arith.cmpi ne, %16, %17 : vector<8x256xi32>
    %c0_i32_8 = arith.constant 0 : i32
    %19 = vector.broadcast %c0_i32_8 : i32 to vector<8x256xi32>
    %20 = arith.cmpi slt, %16, %19 : vector<8x256xi32>
    %c0_i32_9 = arith.constant 0 : i32
    %21 = arith.cmpi slt, %14, %c0_i32_9 : i32
    %22 = vector.broadcast %21 : i1 to vector<8x256xi1>
    %23 = vector.broadcast %22 : vector<8x256xi1> to vector<8x256xi1>
    %24 = arith.xori %20, %23 : vector<8x256xi1>
    %25 = arith.andi %24, %18 : vector<8x256xi1>
    %26 = vector.broadcast %14 : i32 to vector<8x256xi32>
    %27 = arith.addi %16, %26 : vector<8x256xi32>
    %28 = arith.select %25, %27, %16 : vector<8x256xi1>, vector<8x256xi32>
    %c32_i32 = arith.constant 32 : i32
    %29 = vector.broadcast %c32_i32 : i32 to vector<8x256xi32>
    %30 = arith.cmpi slt, %28, %29 : vector<8x256xi32>
    %31 = vector.extract_strided_slice %5 {offsets = [0, 0], sizes = [8, 256], strides = [1, 1]} : vector<72x256xf32> to vector<8x256xf32>
    %cst_10 = arith.constant 0.000000e+00 : f32
    %32 = vector.broadcast %cst_10 : f32 to vector<8x256xf32>
    %33 = arith.select %30, %31, %32 : vector<8x256xi1>, vector<8x256xf32>
    %cst_11 = arith.constant 0.000000e+00 : f32
    %34 = vector.broadcast %cst_11 : f32 to vector<8x64xf32>
    %35 = math.tanh %33 : vector<8x256xf32>
    %cst_12 = arith.constant 5.000000e-01 : f32
    %36 = vector.broadcast %cst_12 : f32 to vector<8x256xf32>
    %37 = arith.mulf %36, %35 : vector<8x256xf32>
    %cst_13 = arith.constant 5.000000e-01 : f32
    %38 = vector.broadcast %cst_13 : f32 to vector<8x256xf32>
    %39 = arith.addf %37, %38 : vector<8x256xf32>
    %40 = arith.select %12, %35, %39 : vector<8x256xi1>, vector<8x256xf32>
    %41 = vector.extract_strided_slice %40 {offsets = [0, 0], sizes = [8, 64], strides = [1, 1]} : vector<8x256xf32> to vector<8x64xf32>
    %42 = vector.extract_strided_slice %40 {offsets = [0, 64], sizes = [8, 64], strides = [1, 1]} : vector<8x256xf32> to vector<8x64xf32>
    %43 = vector.extract_strided_slice %40 {offsets = [0, 128], sizes = [8, 64], strides = [1, 1]} : vector<8x256xf32> to vector<8x64xf32>
    %44 = vector.extract_strided_slice %40 {offsets = [0, 192], sizes = [8, 64], strides = [1, 1]} : vector<8x256xf32> to vector<8x64xf32>
    %45 = arith.mulf %42, %34 : vector<8x64xf32>
    %46 = arith.mulf %41, %43 : vector<8x64xf32>
    %47 = arith.addf %45, %46 : vector<8x64xf32>
    %48 = math.tanh %47 : vector<8x64xf32>
    %49 = arith.mulf %44, %48 : vector<8x64xf32>
    %cst_14 = arith.constant dense<0.000000e+00> : vector<8x256xf32>
    %50 = tpu.matmul %49, %6, %cst_14 {dimension_numbers = #tpu.dot_dimension_numbers<[1], [0], [0], [1], [0, 0, 1, 1], [], []>} : vector<8x64xf32>, vector<64x256xf32>, vector<8x256xf32> -> vector<8x256xf32>
    %51 = vector.extract_strided_slice %5 {offsets = [8, 0], sizes = [8, 256], strides = [1, 1]} : vector<72x256xf32> to vector<8x256xf32>
    %52 = arith.addf %50, %51 : vector<8x256xf32>
    %53 = math.tanh %52 : vector<8x256xf32>
    %cst_15 = arith.constant 5.000000e-01 : f32
    %54 = vector.broadcast %cst_15 : f32 to vector<8x256xf32>
    %55 = arith.mulf %54, %53 : vector<8x256xf32>
    %cst_16 = arith.constant 5.000000e-01 : f32
    %56 = vector.broadcast %cst_16 : f32 to vector<8x256xf32>
    %57 = arith.addf %55, %56 : vector<8x256xf32>
    %58 = arith.select %12, %53, %57 : vector<8x256xi1>, vector<8x256xf32>
    %59 = vector.extract_strided_slice %58 {offsets = [0, 0], sizes = [8, 64], strides = [1, 1]} : vector<8x256xf32> to vector<8x64xf32>
    %60 = vector.extract_strided_slice %58 {offsets = [0, 64], sizes = [8, 64], strides = [1, 1]} : vector<8x256xf32> to vector<8x64xf32>
    %61 = vector.extract_strided_slice %58 {offsets = [0, 128], sizes = [8, 64], strides = [1, 1]} : vector<8x256xf32> to vector<8x64xf32>
    %62 = vector.extract_strided_slice %58 {offsets = [0, 192], sizes = [8, 64], strides = [1, 1]} : vector<8x256xf32> to vector<8x64xf32>
    %63 = arith.mulf %60, %47 : vector<8x64xf32>
    %64 = arith.mulf %59, %61 : vector<8x64xf32>
    %65 = arith.addf %63, %64 : vector<8x64xf32>
    %66 = math.tanh %65 : vector<8x64xf32>
    %67 = arith.mulf %62, %66 : vector<8x64xf32>
    %cst_17 = arith.constant dense<0.000000e+00> : vector<8x256xf32>
    %68 = tpu.matmul %67, %6, %cst_17 {dimension_numbers = #tpu.dot_dimension_numbers<[1], [0], [0], [1], [0, 0, 1, 1], [], []>} : vector<8x64xf32>, vector<64x256xf32>, vector<8x256xf32> -> vector<8x256xf32>
    %69 = vector.extract_strided_slice %5 {offsets = [16, 0], sizes = [8, 256], strides = [1, 1]} : vector<72x256xf32> to vector<8x256xf32>
    %70 = arith.addf %68, %69 : vector<8x256xf32>
    %71 = math.tanh %70 : vector<8x256xf32>
    %cst_18 = arith.constant 5.000000e-01 : f32
    %72 = vector.broadcast %cst_18 : f32 to vector<8x256xf32>
    %73 = arith.mulf %72, %71 : vector<8x256xf32>
    %cst_19 = arith.constant 5.000000e-01 : f32
    %74 = vector.broadcast %cst_19 : f32 to vector<8x256xf32>
    %75 = arith.addf %73, %74 : vector<8x256xf32>
    %76 = arith.select %12, %71, %75 : vector<8x256xi1>, vector<8x256xf32>
    %77 = vector.extract_strided_slice %76 {offsets = [0, 0], sizes = [8, 64], strides = [1, 1]} : vector<8x256xf32> to vector<8x64xf32>
    %78 = vector.extract_strided_slice %76 {offsets = [0, 64], sizes = [8, 64], strides = [1, 1]} : vector<8x256xf32> to vector<8x64xf32>
    %79 = vector.extract_strided_slice %76 {offsets = [0, 128], sizes = [8, 64], strides = [1, 1]} : vector<8x256xf32> to vector<8x64xf32>
    %80 = vector.extract_strided_slice %76 {offsets = [0, 192], sizes = [8, 64], strides = [1, 1]} : vector<8x256xf32> to vector<8x64xf32>
    %81 = arith.mulf %78, %65 : vector<8x64xf32>
    %82 = arith.mulf %77, %79 : vector<8x64xf32>
    %83 = arith.addf %81, %82 : vector<8x64xf32>
    %84 = math.tanh %83 : vector<8x64xf32>
    %85 = arith.mulf %80, %84 : vector<8x64xf32>
    %cst_20 = arith.constant dense<0.000000e+00> : vector<8x256xf32>
    %86 = tpu.matmul %85, %6, %cst_20 {dimension_numbers = #tpu.dot_dimension_numbers<[1], [0], [0], [1], [0, 0, 1, 1], [], []>} : vector<8x64xf32>, vector<64x256xf32>, vector<8x256xf32> -> vector<8x256xf32>
    %87 = vector.extract_strided_slice %5 {offsets = [24, 0], sizes = [8, 256], strides = [1, 1]} : vector<72x256xf32> to vector<8x256xf32>
    %88 = arith.addf %86, %87 : vector<8x256xf32>
    %89 = math.tanh %88 : vector<8x256xf32>
    %cst_21 = arith.constant 5.000000e-01 : f32
    %90 = vector.broadcast %cst_21 : f32 to vector<8x256xf32>
    %91 = arith.mulf %90, %89 : vector<8x256xf32>
    %cst_22 = arith.constant 5.000000e-01 : f32
    %92 = vector.broadcast %cst_22 : f32 to vector<8x256xf32>
    %93 = arith.addf %91, %92 : vector<8x256xf32>
    %94 = arith.select %12, %89, %93 : vector<8x256xi1>, vector<8x256xf32>
    %95 = vector.extract_strided_slice %94 {offsets = [0, 0], sizes = [8, 64], strides = [1, 1]} : vector<8x256xf32> to vector<8x64xf32>
    %96 = vector.extract_strided_slice %94 {offsets = [0, 64], sizes = [8, 64], strides = [1, 1]} : vector<8x256xf32> to vector<8x64xf32>
    %97 = vector.extract_strided_slice %94 {offsets = [0, 128], sizes = [8, 64], strides = [1, 1]} : vector<8x256xf32> to vector<8x64xf32>
    %98 = vector.extract_strided_slice %94 {offsets = [0, 192], sizes = [8, 64], strides = [1, 1]} : vector<8x256xf32> to vector<8x64xf32>
    %99 = arith.mulf %96, %83 : vector<8x64xf32>
    %100 = arith.mulf %95, %97 : vector<8x64xf32>
    %101 = arith.addf %99, %100 : vector<8x64xf32>
    %102 = math.tanh %101 : vector<8x64xf32>
    %103 = arith.mulf %98, %102 : vector<8x64xf32>
    %cst_23 = arith.constant dense<0.000000e+00> : vector<8x256xf32>
    %104 = tpu.matmul %103, %6, %cst_23 {dimension_numbers = #tpu.dot_dimension_numbers<[1], [0], [0], [1], [0, 0, 1, 1], [], []>} : vector<8x64xf32>, vector<64x256xf32>, vector<8x256xf32> -> vector<8x256xf32>
    %105 = vector.extract_strided_slice %5 {offsets = [32, 0], sizes = [8, 256], strides = [1, 1]} : vector<72x256xf32> to vector<8x256xf32>
    %106 = arith.addf %104, %105 : vector<8x256xf32>
    %107 = math.tanh %106 : vector<8x256xf32>
    %cst_24 = arith.constant 5.000000e-01 : f32
    %108 = vector.broadcast %cst_24 : f32 to vector<8x256xf32>
    %109 = arith.mulf %108, %107 : vector<8x256xf32>
    %cst_25 = arith.constant 5.000000e-01 : f32
    %110 = vector.broadcast %cst_25 : f32 to vector<8x256xf32>
    %111 = arith.addf %109, %110 : vector<8x256xf32>
    %112 = arith.select %12, %107, %111 : vector<8x256xi1>, vector<8x256xf32>
    %113 = vector.extract_strided_slice %112 {offsets = [0, 0], sizes = [8, 64], strides = [1, 1]} : vector<8x256xf32> to vector<8x64xf32>
    %114 = vector.extract_strided_slice %112 {offsets = [0, 64], sizes = [8, 64], strides = [1, 1]} : vector<8x256xf32> to vector<8x64xf32>
    %115 = vector.extract_strided_slice %112 {offsets = [0, 128], sizes = [8, 64], strides = [1, 1]} : vector<8x256xf32> to vector<8x64xf32>
    %116 = vector.extract_strided_slice %112 {offsets = [0, 192], sizes = [8, 64], strides = [1, 1]} : vector<8x256xf32> to vector<8x64xf32>
    %117 = arith.mulf %114, %101 : vector<8x64xf32>
    %118 = arith.mulf %113, %115 : vector<8x64xf32>
    %119 = arith.addf %117, %118 : vector<8x64xf32>
    %120 = math.tanh %119 : vector<8x64xf32>
    %121 = arith.mulf %116, %120 : vector<8x64xf32>
    %cst_26 = arith.constant dense<0.000000e+00> : vector<8x256xf32>
    %122 = tpu.matmul %121, %6, %cst_26 {dimension_numbers = #tpu.dot_dimension_numbers<[1], [0], [0], [1], [0, 0, 1, 1], [], []>} : vector<8x64xf32>, vector<64x256xf32>, vector<8x256xf32> -> vector<8x256xf32>
    %123 = vector.extract_strided_slice %5 {offsets = [40, 0], sizes = [8, 256], strides = [1, 1]} : vector<72x256xf32> to vector<8x256xf32>
    %124 = arith.addf %122, %123 : vector<8x256xf32>
    %125 = math.tanh %124 : vector<8x256xf32>
    %cst_27 = arith.constant 5.000000e-01 : f32
    %126 = vector.broadcast %cst_27 : f32 to vector<8x256xf32>
    %127 = arith.mulf %126, %125 : vector<8x256xf32>
    %cst_28 = arith.constant 5.000000e-01 : f32
    %128 = vector.broadcast %cst_28 : f32 to vector<8x256xf32>
    %129 = arith.addf %127, %128 : vector<8x256xf32>
    %130 = arith.select %12, %125, %129 : vector<8x256xi1>, vector<8x256xf32>
    %131 = vector.extract_strided_slice %130 {offsets = [0, 0], sizes = [8, 64], strides = [1, 1]} : vector<8x256xf32> to vector<8x64xf32>
    %132 = vector.extract_strided_slice %130 {offsets = [0, 64], sizes = [8, 64], strides = [1, 1]} : vector<8x256xf32> to vector<8x64xf32>
    %133 = vector.extract_strided_slice %130 {offsets = [0, 128], sizes = [8, 64], strides = [1, 1]} : vector<8x256xf32> to vector<8x64xf32>
    %134 = vector.extract_strided_slice %130 {offsets = [0, 192], sizes = [8, 64], strides = [1, 1]} : vector<8x256xf32> to vector<8x64xf32>
    %135 = arith.mulf %132, %119 : vector<8x64xf32>
    %136 = arith.mulf %131, %133 : vector<8x64xf32>
    %137 = arith.addf %135, %136 : vector<8x64xf32>
    %138 = math.tanh %137 : vector<8x64xf32>
    %139 = arith.mulf %134, %138 : vector<8x64xf32>
    %cst_29 = arith.constant dense<0.000000e+00> : vector<8x256xf32>
    %140 = tpu.matmul %139, %6, %cst_29 {dimension_numbers = #tpu.dot_dimension_numbers<[1], [0], [0], [1], [0, 0, 1, 1], [], []>} : vector<8x64xf32>, vector<64x256xf32>, vector<8x256xf32> -> vector<8x256xf32>
    %141 = vector.extract_strided_slice %5 {offsets = [48, 0], sizes = [8, 256], strides = [1, 1]} : vector<72x256xf32> to vector<8x256xf32>
    %142 = arith.addf %140, %141 : vector<8x256xf32>
    %143 = math.tanh %142 : vector<8x256xf32>
    %cst_30 = arith.constant 5.000000e-01 : f32
    %144 = vector.broadcast %cst_30 : f32 to vector<8x256xf32>
    %145 = arith.mulf %144, %143 : vector<8x256xf32>
    %cst_31 = arith.constant 5.000000e-01 : f32
    %146 = vector.broadcast %cst_31 : f32 to vector<8x256xf32>
    %147 = arith.addf %145, %146 : vector<8x256xf32>
    %148 = arith.select %12, %143, %147 : vector<8x256xi1>, vector<8x256xf32>
    %149 = vector.extract_strided_slice %148 {offsets = [0, 0], sizes = [8, 64], strides = [1, 1]} : vector<8x256xf32> to vector<8x64xf32>
    %150 = vector.extract_strided_slice %148 {offsets = [0, 64], sizes = [8, 64], strides = [1, 1]} : vector<8x256xf32> to vector<8x64xf32>
    %151 = vector.extract_strided_slice %148 {offsets = [0, 128], sizes = [8, 64], strides = [1, 1]} : vector<8x256xf32> to vector<8x64xf32>
    %152 = vector.extract_strided_slice %148 {offsets = [0, 192], sizes = [8, 64], strides = [1, 1]} : vector<8x256xf32> to vector<8x64xf32>
    %153 = arith.mulf %150, %137 : vector<8x64xf32>
    %154 = arith.mulf %149, %151 : vector<8x64xf32>
    %155 = arith.addf %153, %154 : vector<8x64xf32>
    %156 = math.tanh %155 : vector<8x64xf32>
    %157 = arith.mulf %152, %156 : vector<8x64xf32>
    %cst_32 = arith.constant dense<0.000000e+00> : vector<8x256xf32>
    %158 = tpu.matmul %157, %6, %cst_32 {dimension_numbers = #tpu.dot_dimension_numbers<[1], [0], [0], [1], [0, 0, 1, 1], [], []>} : vector<8x64xf32>, vector<64x256xf32>, vector<8x256xf32> -> vector<8x256xf32>
    %159 = vector.extract_strided_slice %5 {offsets = [56, 0], sizes = [8, 256], strides = [1, 1]} : vector<72x256xf32> to vector<8x256xf32>
    %160 = arith.addf %158, %159 : vector<8x256xf32>
    %161 = math.tanh %160 : vector<8x256xf32>
    %cst_33 = arith.constant 5.000000e-01 : f32
    %162 = vector.broadcast %cst_33 : f32 to vector<8x256xf32>
    %163 = arith.mulf %162, %161 : vector<8x256xf32>
    %cst_34 = arith.constant 5.000000e-01 : f32
    %164 = vector.broadcast %cst_34 : f32 to vector<8x256xf32>
    %165 = arith.addf %163, %164 : vector<8x256xf32>
    %166 = arith.select %12, %161, %165 : vector<8x256xi1>, vector<8x256xf32>
    %167 = vector.extract_strided_slice %166 {offsets = [0, 0], sizes = [8, 64], strides = [1, 1]} : vector<8x256xf32> to vector<8x64xf32>
    %168 = vector.extract_strided_slice %166 {offsets = [0, 64], sizes = [8, 64], strides = [1, 1]} : vector<8x256xf32> to vector<8x64xf32>
    %169 = vector.extract_strided_slice %166 {offsets = [0, 128], sizes = [8, 64], strides = [1, 1]} : vector<8x256xf32> to vector<8x64xf32>
    %170 = vector.extract_strided_slice %166 {offsets = [0, 192], sizes = [8, 64], strides = [1, 1]} : vector<8x256xf32> to vector<8x64xf32>
    %171 = arith.mulf %168, %155 : vector<8x64xf32>
    %172 = arith.mulf %167, %169 : vector<8x64xf32>
    %173 = arith.addf %171, %172 : vector<8x64xf32>
    %174 = math.tanh %173 : vector<8x64xf32>
    %175 = arith.mulf %170, %174 : vector<8x64xf32>
    %176 = vector.extract_strided_slice %175 {offsets = [0, 0], sizes = [8, 32], strides = [1, 1]} : vector<8x64xf32> to vector<8x32xf32>
    %177 = vector.extract_strided_slice %173 {offsets = [0, 0], sizes = [8, 32], strides = [1, 1]} : vector<8x64xf32> to vector<8x32xf32>
    %cst_35 = arith.constant dense<0.000000e+00> : vector<8x256xf32>
    %178 = tpu.matmul %175, %6, %cst_35 {dimension_numbers = #tpu.dot_dimension_numbers<[1], [0], [0], [1], [0, 0, 1, 1], [], []>} : vector<8x64xf32>, vector<64x256xf32>, vector<8x256xf32> -> vector<8x256xf32>
    %179 = vector.extract_strided_slice %5 {offsets = [64, 0], sizes = [8, 256], strides = [1, 1]} : vector<72x256xf32> to vector<8x256xf32>
    %180 = arith.addf %178, %179 : vector<8x256xf32>
    %181 = math.tanh %180 : vector<8x256xf32>
    %cst_36 = arith.constant 5.000000e-01 : f32
    %182 = vector.broadcast %cst_36 : f32 to vector<8x256xf32>
    %183 = arith.mulf %182, %181 : vector<8x256xf32>
    %cst_37 = arith.constant 5.000000e-01 : f32
    %184 = vector.broadcast %cst_37 : f32 to vector<8x256xf32>
    %185 = arith.addf %183, %184 : vector<8x256xf32>
    %186 = arith.select %12, %181, %185 : vector<8x256xi1>, vector<8x256xf32>
    %187 = vector.extract_strided_slice %186 {offsets = [0, 0], sizes = [8, 64], strides = [1, 1]} : vector<8x256xf32> to vector<8x64xf32>
    %188 = vector.extract_strided_slice %186 {offsets = [0, 64], sizes = [8, 64], strides = [1, 1]} : vector<8x256xf32> to vector<8x64xf32>
    %189 = vector.extract_strided_slice %186 {offsets = [0, 128], sizes = [8, 64], strides = [1, 1]} : vector<8x256xf32> to vector<8x64xf32>
    %190 = vector.extract_strided_slice %186 {offsets = [0, 192], sizes = [8, 64], strides = [1, 1]} : vector<8x256xf32> to vector<8x64xf32>
    %191 = arith.mulf %188, %173 : vector<8x64xf32>
    %192 = arith.mulf %187, %189 : vector<8x64xf32>
    %193 = arith.addf %191, %192 : vector<8x64xf32>
    %194 = math.tanh %193 : vector<8x64xf32>
    %195 = arith.mulf %190, %194 : vector<8x64xf32>
    %196 = vector.extract_strided_slice %195 {offsets = [0, 32], sizes = [8, 32], strides = [1, 1]} : vector<8x64xf32> to vector<8x32xf32>
    %197 = vector.extract_strided_slice %193 {offsets = [0, 32], sizes = [8, 32], strides = [1, 1]} : vector<8x64xf32> to vector<8x32xf32>
    %198 = tpu.concatenate %176, %196, %177, %197 in 1 : vector<8x32xf32>, vector<8x32xf32>, vector<8x32xf32>, vector<8x32xf32> -> vector<8x128xf32>
    %c0_38 = arith.constant 0 : index
    %c0_39 = arith.constant 0 : index
    %199 = vector.load %arg4[%c0_38, %c0_39] : memref<8x128xf32, #tpu.memory_space<vmem>>, vector<8x128xf32>
    tpu.vector_store %arg4[%c0_38, %c0_39], %198 {strides = array<i32>} : memref<8x128xf32, #tpu.memory_space<vmem>>, vector<8x128xf32>,
    return
  }
}

</mosaic_0001>

<llo_original>
// kernel: tpu_custom_call.1
$region0: #{tpu_custom_call.1}
  #allocation0 [shape = 'u32[]', space=smem, size = 0x4, offset = 0x4, fixed_abs, tag = 'smem constant byte address 0x4 - core index']
  #allocation1 [shape = 'u32[144,128]{1,0:T(1,128)}', space=vmem, size = 0x12000, scoped, tag = 'internal scratch']
  %s0 = inlined_call_operand.vmem [shape: f32[72,16], index: 0, kind: input, shape index: {}]
  %s1 = inlined_call_operand.vmem [shape: f32[16,256], index: 1, kind: input, shape index: {}]
  %s2 = inlined_call_operand.vmem [shape: f32[1,256], index: 2, kind: input, shape index: {}]
  %s3 = inlined_call_operand.hbm [shape: f32[64,256], index: 3, kind: input, shape index: {}]
  %s4 = inlined_call_operand.hbm [shape: f32[8,128], index: 4, kind: output, shape index: {}]
  %s5 = sld [smem:[#allocation0]]
  $region30: #{tpu_custom_call.1} parent=0
    _
  %s7 = ssub.s32 1, %s5
  %s8 = scalar_select 0, %s7, %s5
  $region1: #{tpu_custom_call.1} parent=0
    #allocation2 [shape = 'u8[65536]{0}', space=vmem, size = 0x10000, scoped, tag = 'input window, operand 3, single buffered']
    #allocation3 [shape = 's32[1]{0}', space=sflag, size = 0x4, scoped, tag = 'scoped memory for tpu_custom_call.1']
    #allocation4 [shape = 's32[1]{0}', space=sflag, size = 0x4, scoped, tag = 'scoped memory for tpu_custom_call.1']
    #allocation5 [shape = 'u8[4096]{0}', space=vmem, size = 0x1000, scoped, tag = 'output window, operand 0, single buffered']
    %9 = vsyncpa [#allocation3], 0
    %10 = vsyncpa [#allocation4], 0
    // Predicated region
    $region2: #{tpu_custom_call.1} parent=1 // pred_check
      _
    $region3: #{tpu_custom_call.1} parent=1 // pred_check_branch
      %12 = sbr.rel (0) target = $region5
    $region4: #{tpu_custom_call.1} parent=1 // pred_region
      _
    $region5: #{tpu_custom_call.1} parent=1 // pred_fallthru
      _
    // Predicated region
    $region6: #{tpu_custom_call.1} parent=1 // pred_check
      _
    $region7: #{tpu_custom_call.1} parent=1 // pred_check_branch
      %14 = sbr.rel (0) target = $region9
    $region8: #{tpu_custom_call.1} parent=1 // pred_region
      _
    $region9: #{tpu_custom_call.1} parent=1 // pred_fallthru
      _
    // Predicated region
    $region10: #{tpu_custom_call.1} parent=1 // pred_check
      _
    $region11: #{tpu_custom_call.1} parent=1 // pred_check_branch
      %16 = sbr.rel (0) target = $region13
    $region12: #{tpu_custom_call.1} parent=1 // pred_region
      _
    $region13: #{tpu_custom_call.1} parent=1 // pred_fallthru
      _
    // Predicated region
    $region14: #{tpu_custom_call.1} parent=1 // pred_check
      _
    $region15: #{tpu_custom_call.1} parent=1 // pred_check_branch
      %18 = sbr.rel (0) target = $region17
    $region16: #{tpu_custom_call.1} parent=1 // pred_region
      %s20 = ssub.s32 2048, 2048
      %21 = vsyncadd [#allocation3], %s20
      %s22 = sshll.u32 [#allocation2], 4
      %s23 = int_to_ptr.vmem [resolvable:$true] %s22
      %28 = dma.hbm_to_vmem [thread:$0]  %s3, 2048, %s23, [#allocation3], 256, 256, 16
    $region17: #{tpu_custom_call.1} parent=1 // pred_fallthru
      _
    // Predicated region
    $region18: #{tpu_custom_call.1} parent=1 // pred_check
      _
    $region19: #{tpu_custom_call.1} parent=1 // pred_check_branch
      %30 = sbr.rel (0) target = $region21
    $region20: #{tpu_custom_call.1} parent=1 // pred_region
      %31 = dma.done [#allocation3], 2048
    $region21: #{tpu_custom_call.1} parent=1 // pred_fallthru
      _
    %v32 = vld [vmem:[%s0] sm:$0xff]
    %v33 = vld [vmem:[%s0 + $0x8] sm:$0xff]
    %v34 = vld [vmem:[%s0 + $0x10] sm:$0xff]
    %v35 = vld [vmem:[%s0 + $0x18] sm:$0xff]
    %v36 = vld [vmem:[%s0 + $0x20] sm:$0xff]
    %v37 = vld [vmem:[%s0 + $0x28] sm:$0xff]
    %v38 = vld [vmem:[%s0 + $0x30] sm:$0xff]
    %v39 = vld [vmem:[%s0 + $0x38] sm:$0xff]
    %v40 = vld [vmem:[%s0 + $0x40] sm:$0xff]
    %v41 = vld [vmem:[%s1] sm:$0xff]
    %v42 = vld [vmem:[%s1 + $0x8] sm:$0xff]
    %v43 = vld [vmem:[%s1 + $0x10] sm:$0xff]
    %v44 = vld [vmem:[%s1 + $0x18] sm:$0xff]
    %v45 = vld [vmem:[%s2] sm:$0x3]
    %v47 = vlaneseq
    %v48 = vshrl.u32 %v47, 7
    %v49 = vsub.s32 0, %v48
    %v50 = vrot.slane %v45, %v49
    %v51 = vlaneseq
    %v52 = vshrl.u32 %v51, 7
    %v53 = vsub.s32 1, %v52
    %v54 = vrot.slane %v45, %v53
    %vm57 = vcmask 130048
    %v59 = vsel %vm57, %v32, 0
    %v62 = vsel %vm57, %v33, 0
    %v65 = vsel %vm57, %v34, 0
    %v68 = vsel %vm57, %v35, 0
    %v71 = vsel %vm57, %v36, 0
    %v74 = vsel %vm57, %v37, 0
    %v77 = vsel %vm57, %v38, 0
    %v80 = vsel %vm57, %v39, 0
    %v83 = vsel %vm57, %v40, 0
    %85 = vmatprep.subr.mxu0 %v42
    %86 = vmatpush1.msra.mxu0 %v41
    %87 = vmatprep.subr.mxu0 %v44
    %88 = vmatpush1.msra.mxu0 %v43
    %89 = vmatprep.subr.mxu0 0.0
    %90 = vmatpush1.msra.mxu0 0.0
    %91 = vmatprep.subr.mxu0 0.0
    %92 = vmatpush1.msra.mxu0 0.0
    %93 = vmatprep.subr.mxu0 0.0
    %94 = vmatpush1.msra.mxu0 0.0
    %95 = vmatprep.subr.mxu0 0.0
    %96 = vmatpush1.msra.mxu0 0.0
    %97 = vmatprep.subr.mxu0 0.0
    %98 = vmatpush1.msra.mxu0 0.0
    %99 = vmatprep.subr.mxu0 0.0
    %100 = vmatpush1.msra.mxu0 0.0
    %101 = vmatprep.subr.mxu0 0.0
    %102 = vmatpush1.msra.mxu0 0.0
    %103 = vmatprep.subr.mxu0 0.0
    %104 = vmatpush1.msra.mxu0 0.0
    %105 = vmatprep.subr.mxu0 0.0
    %106 = vmatpush1.msra.mxu0 0.0
    %107 = vmatprep.subr.mxu0 0.0
    %108 = vmatpush1.msra.mxu0 0.0
    %109 = vmatprep.subr.mxu0 0.0
    %110 = vmatpush1.msra.mxu0 0.0
    %111 = vmatprep.subr.mxu0 0.0
    %112 = vmatpush1.msra.mxu0 0.0
    %113 = vmatprep.subr.mxu0 0.0
    %114 = vmatpush1.msra.mxu0 0.0
    %115 = vmatprep.subr.mxu0 0.0
    %116 = vmatpush1.msra.mxu0 0.0
    %117 = vmatprep.subr.mxu0 0.0
    %118 = vmatpush1.msra.mxu0 0.0
    %119 = vmatprep.subr.mxu0 0.0
    %120 = vmatpush1.msra.mxu0 0.0
    %121 = vmatprep.subr.mxu0 0.0
    %122 = vmatpush1.msra.mxu0 0.0
    %123 = vmatprep.subr.mxu0 0.0
    %124 = vmatpush1.msra.mxu0 0.0
    %125 = vmatprep.subr.mxu0 0.0
    %126 = vmatpush1.msra.mxu0 0.0
    %127 = vmatprep.subr.mxu0 0.0
    %128 = vmatpush1.msra.mxu0 0.0
    %129 = vmatprep.subr.mxu0 0.0
    %130 = vmatpush1.msra.mxu0 0.0
    %131 = vmatprep.subr.mxu0 0.0
    %132 = vmatpush1.msra.mxu0 0.0
    %133 = vmatprep.subr.mxu0 0.0
    %134 = vmatpush1.msra.mxu0 0.0
    %135 = vmatprep.subr.mxu0 0.0
    %136 = vmatpush1.msra.mxu0 0.0
    %137 = vmatprep.subr.mxu0 0.0
    %138 = vmatpush1.msra.mxu0 0.0
    %139 = vmatprep.subr.mxu0 0.0
    %140 = vmatpush1.msra.mxu0 0.0
    %141 = vmatprep.subr.mxu0 0.0
    %142 = vmatpush1.msra.mxu0 0.0
    %143 = vmatprep.subr.mxu0 0.0
    %144 = vmatpush1.msra.mxu0 0.0
    %145 = vmatprep.subr.mxu0 0.0
    %146 = vmatpush1.msra.mxu0 0.0
    %147 = vmatprep.subr.mxu0 0.0
    %148 = vmatpush1.msra.mxu0 0.0
    %149 = vmatprep.mubr.f32.mxu0 0.0
    %150 = vmatmul.mubr.f32.gmra.mrb[0].mxu0 %v59
    %v151 = vpop.f32.mrb[0].mxu0
    %v152 = vadd.f32 %v50, %v151
    %v153 = vpop.f32.mrb[0].mxu0
    %v154 = vadd.f32 %v54, %v153
    %155 = vmatprep.mubr.f32.mxu0 0.0
    %156 = vmatmul.mubr.f32.gmra.mrb[0].mxu0 %v62
    %v157 = vpop.f32.mrb[0].mxu0
    %v158 = vadd.f32 %v50, %v157
    %v159 = vpop.f32.mrb[0].mxu0
    %v160 = vadd.f32 %v54, %v159
    %161 = vmatprep.mubr.f32.mxu0 0.0
    %162 = vmatmul.mubr.f32.gmra.mrb[0].mxu0 %v65
    %v163 = vpop.f32.mrb[0].mxu0
    %v164 = vadd.f32 %v50, %v163
    %v165 = vpop.f32.mrb[0].mxu0
    %v166 = vadd.f32 %v54, %v165
    %167 = vmatprep.mubr.f32.mxu0 0.0
    %168 = vmatmul.mubr.f32.gmra.mrb[0].mxu0 %v68
    %v169 = vpop.f32.mrb[0].mxu0
    %v170 = vadd.f32 %v50, %v169
    %v171 = vpop.f32.mrb[0].mxu0
    %v172 = vadd.f32 %v54, %v171
    %173 = vmatprep.mubr.f32.mxu0 0.0
    %174 = vmatmul.mubr.f32.gmra.mrb[0].mxu0 %v71
    %v175 = vpop.f32.mrb[0].mxu0
    %v176 = vadd.f32 %v50, %v175
    %v177 = vpop.f32.mrb[0].mxu0
    %v178 = vadd.f32 %v54, %v177
    %179 = vmatprep.mubr.f32.mxu0 0.0
    %180 = vmatmul.mubr.f32.gmra.mrb[0].mxu0 %v74
    %v181 = vpop.f32.mrb[0].mxu0
    %v182 = vadd.f32 %v50, %v181
    %v183 = vpop.f32.mrb[0].mxu0
    %v184 = vadd.f32 %v54, %v183
    %185 = vmatprep.mubr.f32.mxu0 0.0
    %186 = vmatmul.mubr.f32.gmra.mrb[0].mxu0 %v77
    %v187 = vpop.f32.mrb[0].mxu0
    %v188 = vadd.f32 %v50, %v187
    %v189 = vpop.f32.mrb[0].mxu0
    %v190 = vadd.f32 %v54, %v189
    %191 = vmatprep.mubr.f32.mxu0 0.0
    %192 = vmatmul.mubr.f32.gmra.mrb[0].mxu0 %v80
    %v193 = vpop.f32.mrb[0].mxu0
    %v194 = vadd.f32 %v50, %v193
    %v195 = vpop.f32.mrb[0].mxu0
    %v196 = vadd.f32 %v54, %v195
    %197 = vmatprep.mubr.f32.mxu0 0.0
    %198 = vmatmul.mubr.f32.gmra.mrb[0].mxu0 %v83
    %v199 = vpop.f32.mrb[0].mxu0
    %v200 = vadd.f32 %v50, %v199
    %v201 = vpop.f32.mrb[0].mxu0
    %v202 = vadd.f32 %v54, %v201
    %203 = vdwg.mxu0
    %v204 = vld [vmem:[#allocation2] sm:$0xff]
    %v205 = vld [vmem:[#allocation2 + $0x8] sm:$0xff]
    %v206 = vld [vmem:[#allocation2 + $0x10] sm:$0xff]
    %v207 = vld [vmem:[#allocation2 + $0x18] sm:$0xff]
    %v208 = vld [vmem:[#allocation2 + $0x20] sm:$0xff]
    %v209 = vld [vmem:[#allocation2 + $0x28] sm:$0xff]
    %v210 = vld [vmem:[#allocation2 + $0x30] sm:$0xff]
    %v211 = vld [vmem:[#allocation2 + $0x38] sm:$0xff]
    %v212 = vld [vmem:[#allocation2 + $0x40] sm:$0xff]
    %v213 = vld [vmem:[#allocation2 + $0x48] sm:$0xff]
    %v214 = vld [vmem:[#allocation2 + $0x50] sm:$0xff]
    %v215 = vld [vmem:[#allocation2 + $0x58] sm:$0xff]
    %v216 = vld [vmem:[#allocation2 + $0x60] sm:$0xff]
    %v217 = vld [vmem:[#allocation2 + $0x68] sm:$0xff]
    %v218 = vld [vmem:[#allocation2 + $0x70] sm:$0xff]
    %v219 = vld [vmem:[#allocation2 + $0x78] sm:$0xff]
    %v220 = vlaneseq
    %v221 = vand.u32 %v220, 127
    %v222 = vadd.s32 %v221, 128
    %vm223 = vcmp.ge.s32.totalorder %v221, 128
    %vm224 = vcmp.ge.s32.totalorder %v222, 128
    %vm225 = vcmp.lt.s32.totalorder %v221, 192
    %vm226 = vcmp.lt.s32.totalorder %v222, 192
    %vm227 = vmand %vm223, %vm225
    %vm228 = vmand %vm224, %vm226
    %vm229 = vcmp.lt.s32.totalorder %v221, 0
    %v230 = vsub.s32 0, %v221
    %v231 = vsel %vm229, %v230, %v221
    %v232 = vshrl.u32 %v231, 6
    %v233 = vand.u32 %v231, 63
    %v234 = vsub.s32 0, %v233
    %v235 = vsel %vm229, %v234, %v233
    %vm236 = vcmp.lt.s32.totalorder %v222, 0
    %v237 = vsub.s32 0, %v222
    %v238 = vsel %vm236, %v237, %v222
    %v239 = vshrl.u32 %v238, 6
    %v240 = vand.u32 %v238, 63
    %v241 = vsub.s32 0, %v240
    %v242 = vsel %vm236, %v241, %v240
    %vm243 = vcmp.ne.s32.totalorder %v235, 0
    %vm244 = vcmp.ne.s32.totalorder %v242, 0
    %vm245 = vcmp.lt.s32.totalorder %v235, 0
    %vm246 = vcmp.lt.s32.totalorder %v242, 0
    %vm247 = vmand %vm245, %vm243
    %vm248 = vmand %vm246, %vm244
    %v249 = vadd.s32 %v235, 64
    %v250 = vadd.s32 %v242, 64
    %v251 = vsel %vm247, %v249, %v235
    %v252 = vsel %vm248, %v250, %v242
    %vm253 = vcmp.lt.s32.totalorder %v251, 32
    %vm254 = vcmp.lt.s32.totalorder %v252, 32
    %v255 = vsel %vm253, %v152, 0.0
    %v256 = vsel %vm254, %v154, 0.0
    %v257 = vtanh.pop %v255
    %v258 = vtanh.pop %v256
    %v259 = vmul.f32 %v257, 0.5
    %v260 = vmul.f32 %v258, 0.5
    %v261 = vadd.f32 %v259, 0.5
    %v262 = vadd.f32 %v260, 0.5
    %v263 = vsel %vm227, %v257, %v261
    %v264 = vsel %vm228, %v258, %v262
    %v265 = vmul.f32 %v263, 0.0
    %v266 = vmul.f32 %v263, %v264
    %268 = vrot.lane.b32.xlu0 %v266, 64
    %v269 = vpop.permute.xlu0 %268
    %v271 = vadd.f32 %v265, %v269
    %v272 = vtanh.pop %v271
    %v273 = vmul.f32 %v264, %v272
    %275 = vrot.lane.b32.xlu0 %v273, 64
    %v276 = vpop.permute.xlu0 %275
    %vm277 = vcmask 523264
    %v278 = vsel %vm277, %v276, 0
    %280 = vmatprep.subr.mxu0 %v205
    %281 = vmatpush1.msra.mxu0 %v204
    %282 = vmatprep.subr.mxu0 %v207
    %283 = vmatpush1.msra.mxu0 %v206
    %284 = vmatprep.subr.mxu0 %v209
    %285 = vmatpush1.msra.mxu0 %v208
    %286 = vmatprep.subr.mxu0 %v211
    %287 = vmatpush1.msra.mxu0 %v210
    %288 = vmatprep.subr.mxu0 %v213
    %289 = vmatpush1.msra.mxu0 %v212
    %290 = vmatprep.subr.mxu0 %v215
    %291 = vmatpush1.msra.mxu0 %v214
    %292 = vmatprep.subr.mxu0 %v217
    %293 = vmatpush1.msra.mxu0 %v216
    %294 = vmatprep.subr.mxu0 %v219
    %295 = vmatpush1.msra.mxu0 %v218
    %296 = vmatprep.subr.mxu0 0.0
    %297 = vmatpush1.msra.mxu0 0.0
    %298 = vmatprep.subr.mxu0 0.0
    %299 = vmatpush1.msra.mxu0 0.0
    %300 = vmatprep.subr.mxu0 0.0
    %301 = vmatpush1.msra.mxu0 0.0
    %302 = vmatprep.subr.mxu0 0.0
    %303 = vmatpush1.msra.mxu0 0.0
    %304 = vmatprep.subr.mxu0 0.0
    %305 = vmatpush1.msra.mxu0 0.0
    %306 = vmatprep.subr.mxu0 0.0
    %307 = vmatpush1.msra.mxu0 0.0
    %308 = vmatprep.subr.mxu0 0.0
    %309 = vmatpush1.msra.mxu0 0.0
    %310 = vmatprep.subr.mxu0 0.0
    %311 = vmatpush1.msra.mxu0 0.0
    %312 = vmatprep.subr.mxu0 0.0
    %313 = vmatpush1.msra.mxu0 0.0
    %314 = vmatprep.subr.mxu0 0.0
    %315 = vmatpush1.msra.mxu0 0.0
    %316 = vmatprep.subr.mxu0 0.0
    %317 = vmatpush1.msra.mxu0 0.0
    %318 = vmatprep.subr.mxu0 0.0
    %319 = vmatpush1.msra.mxu0 0.0
    %320 = vmatprep.subr.mxu0 0.0
    %321 = vmatpush1.msra.mxu0 0.0
    %322 = vmatprep.subr.mxu0 0.0
    %323 = vmatpush1.msra.mxu0 0.0
    %324 = vmatprep.subr.mxu0 0.0
    %325 = vmatpush1.msra.mxu0 0.0
    %326 = vmatprep.subr.mxu0 0.0
    %327 = vmatpush1.msra.mxu0 0.0
    %328 = vmatprep.subr.mxu0 0.0
    %329 = vmatpush1.msra.mxu0 0.0
    %330 = vmatprep.subr.mxu0 0.0
    %331 = vmatpush1.msra.mxu0 0.0
    %332 = vmatprep.subr.mxu0 0.0
    %333 = vmatpush1.msra.mxu0 0.0
    %334 = vmatprep.subr.mxu0 0.0
    %335 = vmatpush1.msra.mxu0 0.0
    %336 = vmatprep.subr.mxu0 0.0
    %337 = vmatpush1.msra.mxu0 0.0
    %338 = vmatprep.subr.mxu0 0.0
    %339 = vmatpush1.msra.mxu0 0.0
    %340 = vmatprep.subr.mxu0 0.0
    %341 = vmatpush1.msra.mxu0 0.0
    %342 = vmatprep.subr.mxu0 0.0
    %343 = vmatpush1.msra.mxu0 0.0
    %344 = vmatprep.mubr.f32.mxu0 0.0
    %345 = vmatmul.mubr.f32.gmra.mrb[0].mxu0 %v278
    %v346 = vpop.f32.mrb[0].mxu0
    %v347 = vadd.f32 %v158, %v346
    %v348 = vpop.f32.mrb[0].mxu0
    %v349 = vadd.f32 %v160, %v348
    %350 = vdwg.mxu0
    %v351 = vtanh.pop %v347
    %v352 = vtanh.pop %v349
    %v353 = vmul.f32 %v351, 0.5
    %v354 = vmul.f32 %v352, 0.5
    %v355 = vadd.f32 %v353, 0.5
    %v356 = vadd.f32 %v354, 0.5
    %v357 = vsel %vm227, %v351, %v355
    %v358 = vsel %vm228, %v352, %v356
    %v359 = vmul.f32 %v357, %v271
    %v360 = vmul.f32 %v357, %v358
    %362 = vrot.lane.b32.xlu0 %v360, 64
    %v363 = vpop.permute.xlu0 %362
    %v365 = vadd.f32 %v359, %v363
    %v366 = vtanh.pop %v365
    %v367 = vmul.f32 %v358, %v366
    %369 = vrot.lane.b32.xlu0 %v367, 64
    %v370 = vpop.permute.xlu0 %369
    %v371 = vsel %vm277, %v370, 0
    %373 = vmatprep.subr.mxu0 %v205
    %374 = vmatpush1.msra.mxu0 %v204
    %375 = vmatprep.subr.mxu0 %v207
    %376 = vmatpush1.msra.mxu0 %v206
    %377 = vmatprep.subr.mxu0 %v209
    %378 = vmatpush1.msra.mxu0 %v208
    %379 = vmatprep.subr.mxu0 %v211
    %380 = vmatpush1.msra.mxu0 %v210
    %381 = vmatprep.subr.mxu0 %v213
    %382 = vmatpush1.msra.mxu0 %v212
    %383 = vmatprep.subr.mxu0 %v215
    %384 = vmatpush1.msra.mxu0 %v214
    %385 = vmatprep.subr.mxu0 %v217
    %386 = vmatpush1.msra.mxu0 %v216
    %387 = vmatprep.subr.mxu0 %v219
    %388 = vmatpush1.msra.mxu0 %v218
    %389 = vmatprep.subr.mxu0 0.0
    %390 = vmatpush1.msra.mxu0 0.0
    %391 = vmatprep.subr.mxu0 0.0
    %392 = vmatpush1.msra.mxu0 0.0
    %393 = vmatprep.subr.mxu0 0.0
    %394 = vmatpush1.msra.mxu0 0.0
    %395 = vmatprep.subr.mxu0 0.0
    %396 = vmatpush1.msra.mxu0 0.0
    %397 = vmatprep.subr.mxu0 0.0
    %398 = vmatpush1.msra.mxu0 0.0
    %399 = vmatprep.subr.mxu0 0.0
    %400 = vmatpush1.msra.mxu0 0.0
    %401 = vmatprep.subr.mxu0 0.0
    %402 = vmatpush1.msra.mxu0 0.0
    %403 = vmatprep.subr.mxu0 0.0
    %404 = vmatpush1.msra.mxu0 0.0
    %405 = vmatprep.subr.mxu0 0.0
    %406 = vmatpush1.msra.mxu0 0.0
    %407 = vmatprep.subr.mxu0 0.0
    %408 = vmatpush1.msra.mxu0 0.0
    %409 = vmatprep.subr.mxu0 0.0
    %410 = vmatpush1.msra.mxu0 0.0
    %411 = vmatprep.subr.mxu0 0.0
    %412 = vmatpush1.msra.mxu0 0.0
    %413 = vmatprep.subr.mxu0 0.0
    %414 = vmatpush1.msra.mxu0 0.0
    %415 = vmatprep.subr.mxu0 0.0
    %416 = vmatpush1.msra.mxu0 0.0
    %417 = vmatprep.subr.mxu0 0.0
    %418 = vmatpush1.msra.mxu0 0.0
    %419 = vmatprep.subr.mxu0 0.0
    %420 = vmatpush1.msra.mxu0 0.0
    %421 = vmatprep.subr.mxu0 0.0
    %422 = vmatpush1.msra.mxu0 0.0
    %423 = vmatprep.subr.mxu0 0.0
    %424 = vmatpush1.msra.mxu0 0.0
    %425 = vmatprep.subr.mxu0 0.0
    %426 = vmatpush1.msra.mxu0 0.0
    %427 = vmatprep.subr.mxu0 0.0
    %428 = vmatpush1.msra.mxu0 0.0
    %429 = vmatprep.subr.mxu0 0.0
    %430 = vmatpush1.msra.mxu0 0.0
    %431 = vmatprep.subr.mxu0 0.0
    %432 = vmatpush1.msra.mxu0 0.0
    %433 = vmatprep.subr.mxu0 0.0
    %434 = vmatpush1.msra.mxu0 0.0
    %435 = vmatprep.subr.mxu0 0.0
    %436 = vmatpush1.msra.mxu0 0.0
    %437 = vmatprep.mubr.f32.mxu0 0.0
    %438 = vmatmul.mubr.f32.gmra.mrb[0].mxu0 %v371
    %v439 = vpop.f32.mrb[0].mxu0
    %v440 = vadd.f32 %v164, %v439
    %v441 = vpop.f32.mrb[0].mxu0
    %v442 = vadd.f32 %v166, %v441
    %443 = vdwg.mxu0
    %v444 = vtanh.pop %v440
    %v445 = vtanh.pop %v442
    %v446 = vmul.f32 %v444, 0.5
    %v447 = vmul.f32 %v445, 0.5
    %v448 = vadd.f32 %v446, 0.5
    %v449 = vadd.f32 %v447, 0.5
    %v450 = vsel %vm227, %v444, %v448
    %v451 = vsel %vm228, %v445, %v449
    %v452 = vmul.f32 %v450, %v365
    %v453 = vmul.f32 %v450, %v451
    %455 = vrot.lane.b32.xlu0 %v453, 64
    %v456 = vpop.permute.xlu0 %455
    %v458 = vadd.f32 %v452, %v456
    %v459 = vtanh.pop %v458
    %v460 = vmul.f32 %v451, %v459
    %462 = vrot.lane.b32.xlu0 %v460, 64
    %v463 = vpop.permute.xlu0 %462
    %v464 = vsel %vm277, %v463, 0
    %466 = vmatprep.subr.mxu0 %v205
    %467 = vmatpush1.msra.mxu0 %v204
    %468 = vmatprep.subr.mxu0 %v207
    %469 = vmatpush1.msra.mxu0 %v206
    %470 = vmatprep.subr.mxu0 %v209
    %471 = vmatpush1.msra.mxu0 %v208
    %472 = vmatprep.subr.mxu0 %v211
    %473 = vmatpush1.msra.mxu0 %v210
    %474 = vmatprep.subr.mxu0 %v213
    %475 = vmatpush1.msra.mxu0 %v212
    %476 = vmatprep.subr.mxu0 %v215
    %477 = vmatpush1.msra.mxu0 %v214
    %478 = vmatprep.subr.mxu0 %v217
    %479 = vmatpush1.msra.mxu0 %v216
    %480 = vmatprep.subr.mxu0 %v219
    %481 = vmatpush1.msra.mxu0 %v218
    %482 = vmatprep.subr.mxu0 0.0
    %483 = vmatpush1.msra.mxu0 0.0
    %484 = vmatprep.subr.mxu0 0.0
    %485 = vmatpush1.msra.mxu0 0.0
    %486 = vmatprep.subr.mxu0 0.0
    %487 = vmatpush1.msra.mxu0 0.0
    %488 = vmatprep.subr.mxu0 0.0
    %489 = vmatpush1.msra.mxu0 0.0
    %490 = vmatprep.subr.mxu0 0.0
    %491 = vmatpush1.msra.mxu0 0.0
    %492 = vmatprep.subr.mxu0 0.0
    %493 = vmatpush1.msra.mxu0 0.0
    %494 = vmatprep.subr.mxu0 0.0
    %495 = vmatpush1.msra.mxu0 0.0
    %496 = vmatprep.subr.mxu0 0.0
    %497 = vmatpush1.msra.mxu0 0.0
    %498 = vmatprep.subr.mxu0 0.0
    %499 = vmatpush1.msra.mxu0 0.0
    %500 = vmatprep.subr.mxu0 0.0
    %501 = vmatpush1.msra.mxu0 0.0
    %502 = vmatprep.subr.mxu0 0.0
    %503 = vmatpush1.msra.mxu0 0.0
    %504 = vmatprep.subr.mxu0 0.0
    %505 = vmatpush1.msra.mxu0 0.0
    %506 = vmatprep.subr.mxu0 0.0
    %507 = vmatpush1.msra.mxu0 0.0
    %508 = vmatprep.subr.mxu0 0.0
    %509 = vmatpush1.msra.mxu0 0.0
    %510 = vmatprep.subr.mxu0 0.0
    %511 = vmatpush1.msra.mxu0 0.0
    %512 = vmatprep.subr.mxu0 0.0
    %513 = vmatpush1.msra.mxu0 0.0
    %514 = vmatprep.subr.mxu0 0.0
    %515 = vmatpush1.msra.mxu0 0.0
    %516 = vmatprep.subr.mxu0 0.0
    %517 = vmatpush1.msra.mxu0 0.0
    %518 = vmatprep.subr.mxu0 0.0
    %519 = vmatpush1.msra.mxu0 0.0
    %520 = vmatprep.subr.mxu0 0.0
    %521 = vmatpush1.msra.mxu0 0.0
    %522 = vmatprep.subr.mxu0 0.0
    %523 = vmatpush1.msra.mxu0 0.0
    %524 = vmatprep.subr.mxu0 0.0
    %525 = vmatpush1.msra.mxu0 0.0
    %526 = vmatprep.subr.mxu0 0.0
    %527 = vmatpush1.msra.mxu0 0.0
    %528 = vmatprep.subr.mxu0 0.0
    %529 = vmatpush1.msra.mxu0 0.0
    %530 = vmatprep.mubr.f32.mxu0 0.0
    %531 = vmatmul.mubr.f32.gmra.mrb[0].mxu0 %v464
    %v532 = vpop.f32.mrb[0].mxu0
    %v533 = vadd.f32 %v170, %v532
    %v534 = vpop.f32.mrb[0].mxu0
    %v535 = vadd.f32 %v172, %v534
    %536 = vdwg.mxu0
    %v537 = vtanh.pop %v533
    %v538 = vtanh.pop %v535
    %v539 = vmul.f32 %v537, 0.5
    %v540 = vmul.f32 %v538, 0.5
    %v541 = vadd.f32 %v539, 0.5
    %v542 = vadd.f32 %v540, 0.5
    %v543 = vsel %vm227, %v537, %v541
    %v544 = vsel %vm228, %v538, %v542
    %v545 = vmul.f32 %v543, %v458
    %v546 = vmul.f32 %v543, %v544
    %548 = vrot.lane.b32.xlu0 %v546, 64
    %v549 = vpop.permute.xlu0 %548
    %v551 = vadd.f32 %v545, %v549
    %v552 = vtanh.pop %v551
    %v553 = vmul.f32 %v544, %v552
    %555 = vrot.lane.b32.xlu0 %v553, 64
    %v556 = vpop.permute.xlu0 %555
    %v557 = vsel %vm277, %v556, 0
    %559 = vmatprep.subr.mxu0 %v205
    %560 = vmatpush1.msra.mxu0 %v204
    %561 = vmatprep.subr.mxu0 %v207
    %562 = vmatpush1.msra.mxu0 %v206
    %563 = vmatprep.subr.mxu0 %v209
    %564 = vmatpush1.msra.mxu0 %v208
    %565 = vmatprep.subr.mxu0 %v211
    %566 = vmatpush1.msra.mxu0 %v210
    %567 = vmatprep.subr.mxu0 %v213
    %568 = vmatpush1.msra.mxu0 %v212
    %569 = vmatprep.subr.mxu0 %v215
    %570 = vmatpush1.msra.mxu0 %v214
    %571 = vmatprep.subr.mxu0 %v217
    %572 = vmatpush1.msra.mxu0 %v216
    %573 = vmatprep.subr.mxu0 %v219
    %574 = vmatpush1.msra.mxu0 %v218
    %575 = vmatprep.subr.mxu0 0.0
    %576 = vmatpush1.msra.mxu0 0.0
    %577 = vmatprep.subr.mxu0 0.0
    %578 = vmatpush1.msra.mxu0 0.0
    %579 = vmatprep.subr.mxu0 0.0
    %580 = vmatpush1.msra.mxu0 0.0
    %581 = vmatprep.subr.mxu0 0.0
    %582 = vmatpush1.msra.mxu0 0.0
    %583 = vmatprep.subr.mxu0 0.0
    %584 = vmatpush1.msra.mxu0 0.0
    %585 = vmatprep.subr.mxu0 0.0
    %586 = vmatpush1.msra.mxu0 0.0
    %587 = vmatprep.subr.mxu0 0.0
    %588 = vmatpush1.msra.mxu0 0.0
    %589 = vmatprep.subr.mxu0 0.0
    %590 = vmatpush1.msra.mxu0 0.0
    %591 = vmatprep.subr.mxu0 0.0
    %592 = vmatpush1.msra.mxu0 0.0
    %593 = vmatprep.subr.mxu0 0.0
    %594 = vmatpush1.msra.mxu0 0.0
    %595 = vmatprep.subr.mxu0 0.0
    %596 = vmatpush1.msra.mxu0 0.0
    %597 = vmatprep.subr.mxu0 0.0
    %598 = vmatpush1.msra.mxu0 0.0
    %599 = vmatprep.subr.mxu0 0.0
    %600 = vmatpush1.msra.mxu0 0.0
    %601 = vmatprep.subr.mxu0 0.0
    %602 = vmatpush1.msra.mxu0 0.0
    %603 = vmatprep.subr.mxu0 0.0
    %604 = vmatpush1.msra.mxu0 0.0
    %605 = vmatprep.subr.mxu0 0.0
    %606 = vmatpush1.msra.mxu0 0.0
    %607 = vmatprep.subr.mxu0 0.0
    %608 = vmatpush1.msra.mxu0 0.0
    %609 = vmatprep.subr.mxu0 0.0
    %610 = vmatpush1.msra.mxu0 0.0
    %611 = vmatprep.subr.mxu0 0.0
    %612 = vmatpush1.msra.mxu0 0.0
    %613 = vmatprep.subr.mxu0 0.0
    %614 = vmatpush1.msra.mxu0 0.0
    %615 = vmatprep.subr.mxu0 0.0
    %616 = vmatpush1.msra.mxu0 0.0
    %617 = vmatprep.subr.mxu0 0.0
    %618 = vmatpush1.msra.mxu0 0.0
    %619 = vmatprep.subr.mxu0 0.0
    %620 = vmatpush1.msra.mxu0 0.0
    %621 = vmatprep.subr.mxu0 0.0
    %622 = vmatpush1.msra.mxu0 0.0
    %623 = vmatprep.mubr.f32.mxu0 0.0
    %624 = vmatmul.mubr.f32.gmra.mrb[0].mxu0 %v557
    %v625 = vpop.f32.mrb[0].mxu0
    %v626 = vadd.f32 %v176, %v625
    %v627 = vpop.f32.mrb[0].mxu0
    %v628 = vadd.f32 %v178, %v627
    %629 = vdwg.mxu0
    %v630 = vtanh.pop %v626
    %v631 = vtanh.pop %v628
    %v632 = vmul.f32 %v630, 0.5
    %v633 = vmul.f32 %v631, 0.5
    %v634 = vadd.f32 %v632, 0.5
    %v635 = vadd.f32 %v633, 0.5
    %v636 = vsel %vm227, %v630, %v634
    %v637 = vsel %vm228, %v631, %v635
    %v638 = vmul.f32 %v636, %v551
    %v639 = vmul.f32 %v636, %v637
    %641 = vrot.lane.b32.xlu0 %v639, 64
    %v642 = vpop.permute.xlu0 %641
    %v644 = vadd.f32 %v638, %v642
    %v645 = vtanh.pop %v644
    %v646 = vmul.f32 %v637, %v645
    %648 = vrot.lane.b32.xlu0 %v646, 64
    %v649 = vpop.permute.xlu0 %648
    %v650 = vsel %vm277, %v649, 0
    %652 = vmatprep.subr.mxu0 %v205
    %653 = vmatpush1.msra.mxu0 %v204
    %654 = vmatprep.subr.mxu0 %v207
    %655 = vmatpush1.msra.mxu0 %v206
    %656 = vmatprep.subr.mxu0 %v209
    %657 = vmatpush1.msra.mxu0 %v208
    %658 = vmatprep.subr.mxu0 %v211
    %659 = vmatpush1.msra.mxu0 %v210
    %660 = vmatprep.subr.mxu0 %v213
    %661 = vmatpush1.msra.mxu0 %v212
    %662 = vmatprep.subr.mxu0 %v215
    %663 = vmatpush1.msra.mxu0 %v214
    %664 = vmatprep.subr.mxu0 %v217
    %665 = vmatpush1.msra.mxu0 %v216
    %666 = vmatprep.subr.mxu0 %v219
    %667 = vmatpush1.msra.mxu0 %v218
    %668 = vmatprep.subr.mxu0 0.0
    %669 = vmatpush1.msra.mxu0 0.0
    %670 = vmatprep.subr.mxu0 0.0
    %671 = vmatpush1.msra.mxu0 0.0
    %672 = vmatprep.subr.mxu0 0.0
    %673 = vmatpush1.msra.mxu0 0.0
    %674 = vmatprep.subr.mxu0 0.0
    %675 = vmatpush1.msra.mxu0 0.0
    %676 = vmatprep.subr.mxu0 0.0
    %677 = vmatpush1.msra.mxu0 0.0
    %678 = vmatprep.subr.mxu0 0.0
    %679 = vmatpush1.msra.mxu0 0.0
    %680 = vmatprep.subr.mxu0 0.0
    %681 = vmatpush1.msra.mxu0 0.0
    %682 = vmatprep.subr.mxu0 0.0
    %683 = vmatpush1.msra.mxu0 0.0
    %684 = vmatprep.subr.mxu0 0.0
    %685 = vmatpush1.msra.mxu0 0.0
    %686 = vmatprep.subr.mxu0 0.0
    %687 = vmatpush1.msra.mxu0 0.0
    %688 = vmatprep.subr.mxu0 0.0
    %689 = vmatpush1.msra.mxu0 0.0
    %690 = vmatprep.subr.mxu0 0.0
    %691 = vmatpush1.msra.mxu0 0.0
    %692 = vmatprep.subr.mxu0 0.0
    %693 = vmatpush1.msra.mxu0 0.0
    %694 = vmatprep.subr.mxu0 0.0
    %695 = vmatpush1.msra.mxu0 0.0
    %696 = vmatprep.subr.mxu0 0.0
    %697 = vmatpush1.msra.mxu0 0.0
    %698 = vmatprep.subr.mxu0 0.0
    %699 = vmatpush1.msra.mxu0 0.0
    %700 = vmatprep.subr.mxu0 0.0
    %701 = vmatpush1.msra.mxu0 0.0
    %702 = vmatprep.subr.mxu0 0.0
    %703 = vmatpush1.msra.mxu0 0.0
    %704 = vmatprep.subr.mxu0 0.0
    %705 = vmatpush1.msra.mxu0 0.0
    %706 = vmatprep.subr.mxu0 0.0
    %707 = vmatpush1.msra.mxu0 0.0
    %708 = vmatprep.subr.mxu0 0.0
    %709 = vmatpush1.msra.mxu0 0.0
    %710 = vmatprep.subr.mxu0 0.0
    %711 = vmatpush1.msra.mxu0 0.0
    %712 = vmatprep.subr.mxu0 0.0
    %713 = vmatpush1.msra.mxu0 0.0
    %714 = vmatprep.subr.mxu0 0.0
    %715 = vmatpush1.msra.mxu0 0.0
    %716 = vmatprep.mubr.f32.mxu0 0.0
    %717 = vmatmul.mubr.f32.gmra.mrb[0].mxu0 %v650
    %v718 = vpop.f32.mrb[0].mxu0
    %v719 = vadd.f32 %v182, %v718
    %v720 = vpop.f32.mrb[0].mxu0
    %v721 = vadd.f32 %v184, %v720
    %722 = vdwg.mxu0
    %v723 = vtanh.pop %v719
    %v724 = vtanh.pop %v721
    %v725 = vmul.f32 %v723, 0.5
    %v726 = vmul.f32 %v724, 0.5
    %v727 = vadd.f32 %v725, 0.5
    %v728 = vadd.f32 %v726, 0.5
    %v729 = vsel %vm227, %v723, %v727
    %v730 = vsel %vm228, %v724, %v728
    %v731 = vmul.f32 %v729, %v644
    %v732 = vmul.f32 %v729, %v730
    %734 = vrot.lane.b32.xlu0 %v732, 64
    %v735 = vpop.permute.xlu0 %734
    %v737 = vadd.f32 %v731, %v735
    %v738 = vtanh.pop %v737
    %v739 = vmul.f32 %v730, %v738
    %741 = vrot.lane.b32.xlu0 %v739, 64
    %v742 = vpop.permute.xlu0 %741
    %v743 = vsel %vm277, %v742, 0
    %745 = vmatprep.subr.mxu0 %v205
    %746 = vmatpush1.msra.mxu0 %v204
    %747 = vmatprep.subr.mxu0 %v207
    %748 = vmatpush1.msra.mxu0 %v206
    %749 = vmatprep.subr.mxu0 %v209
    %750 = vmatpush1.msra.mxu0 %v208
    %751 = vmatprep.subr.mxu0 %v211
    %752 = vmatpush1.msra.mxu0 %v210
    %753 = vmatprep.subr.mxu0 %v213
    %754 = vmatpush1.msra.mxu0 %v212
    %755 = vmatprep.subr.mxu0 %v215
    %756 = vmatpush1.msra.mxu0 %v214
    %757 = vmatprep.subr.mxu0 %v217
    %758 = vmatpush1.msra.mxu0 %v216
    %759 = vmatprep.subr.mxu0 %v219
    %760 = vmatpush1.msra.mxu0 %v218
    %761 = vmatprep.subr.mxu0 0.0
    %762 = vmatpush1.msra.mxu0 0.0
    %763 = vmatprep.subr.mxu0 0.0
    %764 = vmatpush1.msra.mxu0 0.0
    %765 = vmatprep.subr.mxu0 0.0
    %766 = vmatpush1.msra.mxu0 0.0
    %767 = vmatprep.subr.mxu0 0.0
    %768 = vmatpush1.msra.mxu0 0.0
    %769 = vmatprep.subr.mxu0 0.0
    %770 = vmatpush1.msra.mxu0 0.0
    %771 = vmatprep.subr.mxu0 0.0
    %772 = vmatpush1.msra.mxu0 0.0
    %773 = vmatprep.subr.mxu0 0.0
    %774 = vmatpush1.msra.mxu0 0.0
    %775 = vmatprep.subr.mxu0 0.0
    %776 = vmatpush1.msra.mxu0 0.0
    %777 = vmatprep.subr.mxu0 0.0
    %778 = vmatpush1.msra.mxu0 0.0
    %779 = vmatprep.subr.mxu0 0.0
    %780 = vmatpush1.msra.mxu0 0.0
    %781 = vmatprep.subr.mxu0 0.0
    %782 = vmatpush1.msra.mxu0 0.0
    %783 = vmatprep.subr.mxu0 0.0
    %784 = vmatpush1.msra.mxu0 0.0
    %785 = vmatprep.subr.mxu0 0.0
    %786 = vmatpush1.msra.mxu0 0.0
    %787 = vmatprep.subr.mxu0 0.0
    %788 = vmatpush1.msra.mxu0 0.0
    %789 = vmatprep.subr.mxu0 0.0
    %790 = vmatpush1.msra.mxu0 0.0
    %791 = vmatprep.subr.mxu0 0.0
    %792 = vmatpush1.msra.mxu0 0.0
    %793 = vmatprep.subr.mxu0 0.0
    %794 = vmatpush1.msra.mxu0 0.0
    %795 = vmatprep.subr.mxu0 0.0
    %796 = vmatpush1.msra.mxu0 0.0
    %797 = vmatprep.subr.mxu0 0.0
    %798 = vmatpush1.msra.mxu0 0.0
    %799 = vmatprep.subr.mxu0 0.0
    %800 = vmatpush1.msra.mxu0 0.0
    %801 = vmatprep.subr.mxu0 0.0
    %802 = vmatpush1.msra.mxu0 0.0
    %803 = vmatprep.subr.mxu0 0.0
    %804 = vmatpush1.msra.mxu0 0.0
    %805 = vmatprep.subr.mxu0 0.0
    %806 = vmatpush1.msra.mxu0 0.0
    %807 = vmatprep.subr.mxu0 0.0
    %808 = vmatpush1.msra.mxu0 0.0
    %809 = vmatprep.mubr.f32.mxu0 0.0
    %810 = vmatmul.mubr.f32.gmra.mrb[0].mxu0 %v743
    %v811 = vpop.f32.mrb[0].mxu0
    %v812 = vadd.f32 %v188, %v811
    %v813 = vpop.f32.mrb[0].mxu0
    %v814 = vadd.f32 %v190, %v813
    %815 = vdwg.mxu0
    %v816 = vtanh.pop %v812
    %v817 = vtanh.pop %v814
    %v818 = vmul.f32 %v816, 0.5
    %v819 = vmul.f32 %v817, 0.5
    %v820 = vadd.f32 %v818, 0.5
    %v821 = vadd.f32 %v819, 0.5
    %v822 = vsel %vm227, %v816, %v820
    %v823 = vsel %vm228, %v817, %v821
    %v824 = vmul.f32 %v822, %v737
    %v825 = vmul.f32 %v822, %v823
    %827 = vrot.lane.b32.xlu0 %v825, 64
    %v828 = vpop.permute.xlu0 %827
    %v830 = vadd.f32 %v824, %v828
    %v831 = vtanh.pop %v830
    %v832 = vmul.f32 %v823, %v831
    %834 = vrot.lane.b32.xlu0 %v832, 64
    %v835 = vpop.permute.xlu0 %834
    %v836 = vsel %vm277, %v835, 0
    %838 = vmatprep.subr.mxu0 %v205
    %839 = vmatpush1.msra.mxu0 %v204
    %840 = vmatprep.subr.mxu0 %v207
    %841 = vmatpush1.msra.mxu0 %v206
    %842 = vmatprep.subr.mxu0 %v209
    %843 = vmatpush1.msra.mxu0 %v208
    %844 = vmatprep.subr.mxu0 %v211
    %845 = vmatpush1.msra.mxu0 %v210
    %846 = vmatprep.subr.mxu0 %v213
    %847 = vmatpush1.msra.mxu0 %v212
    %848 = vmatprep.subr.mxu0 %v215
    %849 = vmatpush1.msra.mxu0 %v214
    %850 = vmatprep.subr.mxu0 %v217
    %851 = vmatpush1.msra.mxu0 %v216
    %852 = vmatprep.subr.mxu0 %v219
    %853 = vmatpush1.msra.mxu0 %v218
    %854 = vmatprep.subr.mxu0 0.0
    %855 = vmatpush1.msra.mxu0 0.0
    %856 = vmatprep.subr.mxu0 0.0
    %857 = vmatpush1.msra.mxu0 0.0
    %858 = vmatprep.subr.mxu0 0.0
    %859 = vmatpush1.msra.mxu0 0.0
    %860 = vmatprep.subr.mxu0 0.0
    %861 = vmatpush1.msra.mxu0 0.0
    %862 = vmatprep.subr.mxu0 0.0
    %863 = vmatpush1.msra.mxu0 0.0
    %864 = vmatprep.subr.mxu0 0.0
    %865 = vmatpush1.msra.mxu0 0.0
    %866 = vmatprep.subr.mxu0 0.0
    %867 = vmatpush1.msra.mxu0 0.0
    %868 = vmatprep.subr.mxu0 0.0
    %869 = vmatpush1.msra.mxu0 0.0
    %870 = vmatprep.subr.mxu0 0.0
    %871 = vmatpush1.msra.mxu0 0.0
    %872 = vmatprep.subr.mxu0 0.0
    %873 = vmatpush1.msra.mxu0 0.0
    %874 = vmatprep.subr.mxu0 0.0
    %875 = vmatpush1.msra.mxu0 0.0
    %876 = vmatprep.subr.mxu0 0.0
    %877 = vmatpush1.msra.mxu0 0.0
    %878 = vmatprep.subr.mxu0 0.0
    %879 = vmatpush1.msra.mxu0 0.0
    %880 = vmatprep.subr.mxu0 0.0
    %881 = vmatpush1.msra.mxu0 0.0
    %882 = vmatprep.subr.mxu0 0.0
    %883 = vmatpush1.msra.mxu0 0.0
    %884 = vmatprep.subr.mxu0 0.0
    %885 = vmatpush1.msra.mxu0 0.0
    %886 = vmatprep.subr.mxu0 0.0
    %887 = vmatpush1.msra.mxu0 0.0
    %888 = vmatprep.subr.mxu0 0.0
    %889 = vmatpush1.msra.mxu0 0.0
    %890 = vmatprep.subr.mxu0 0.0
    %891 = vmatpush1.msra.mxu0 0.0
    %892 = vmatprep.subr.mxu0 0.0
    %893 = vmatpush1.msra.mxu0 0.0
    %894 = vmatprep.subr.mxu0 0.0
    %895 = vmatpush1.msra.mxu0 0.0
    %896 = vmatprep.subr.mxu0 0.0
    %897 = vmatpush1.msra.mxu0 0.0
    %898 = vmatprep.subr.mxu0 0.0
    %899 = vmatpush1.msra.mxu0 0.0
    %900 = vmatprep.subr.mxu0 0.0
    %901 = vmatpush1.msra.mxu0 0.0
    %902 = vmatprep.mubr.f32.mxu0 0.0
    %903 = vmatmul.mubr.f32.gmra.mrb[0].mxu0 %v836
    %v904 = vpop.f32.mrb[0].mxu0
    %v905 = vadd.f32 %v194, %v904
    %v906 = vpop.f32.mrb[0].mxu0
    %v907 = vadd.f32 %v196, %v906
    %908 = vdwg.mxu0
    %v909 = vtanh.pop %v905
    %v910 = vtanh.pop %v907
    %v911 = vmul.f32 %v909, 0.5
    %v912 = vmul.f32 %v910, 0.5
    %v913 = vadd.f32 %v911, 0.5
    %v914 = vadd.f32 %v912, 0.5
    %v915 = vsel %vm227, %v909, %v913
    %v916 = vsel %vm228, %v910, %v914
    %v917 = vmul.f32 %v915, %v830
    %v918 = vmul.f32 %v915, %v916
    %920 = vrot.lane.b32.xlu0 %v918, 64
    %v921 = vpop.permute.xlu0 %920
    %v923 = vadd.f32 %v917, %v921
    %v924 = vtanh.pop %v923
    %v925 = vmul.f32 %v916, %v924
    %927 = vrot.lane.b32.xlu0 %v925, 64
    %v928 = vpop.permute.xlu0 %927
    %v929 = vsel %vm277, %v928, 0
    %931 = vmatprep.subr.mxu0 %v205
    %932 = vmatpush1.msra.mxu0 %v204
    %933 = vmatprep.subr.mxu0 %v207
    %934 = vmatpush1.msra.mxu0 %v206
    %935 = vmatprep.subr.mxu0 %v209
    %936 = vmatpush1.msra.mxu0 %v208
    %937 = vmatprep.subr.mxu0 %v211
    %938 = vmatpush1.msra.mxu0 %v210
    %939 = vmatprep.subr.mxu0 %v213
    %940 = vmatpush1.msra.mxu0 %v212
    %941 = vmatprep.subr.mxu0 %v215
    %942 = vmatpush1.msra.mxu0 %v214
    %943 = vmatprep.subr.mxu0 %v217
    %944 = vmatpush1.msra.mxu0 %v216
    %945 = vmatprep.subr.mxu0 %v219
    %946 = vmatpush1.msra.mxu0 %v218
    %947 = vmatprep.subr.mxu0 0.0
    %948 = vmatpush1.msra.mxu0 0.0
    %949 = vmatprep.subr.mxu0 0.0
    %950 = vmatpush1.msra.mxu0 0.0
    %951 = vmatprep.subr.mxu0 0.0
    %952 = vmatpush1.msra.mxu0 0.0
    %953 = vmatprep.subr.mxu0 0.0
    %954 = vmatpush1.msra.mxu0 0.0
    %955 = vmatprep.subr.mxu0 0.0
    %956 = vmatpush1.msra.mxu0 0.0
    %957 = vmatprep.subr.mxu0 0.0
    %958 = vmatpush1.msra.mxu0 0.0
    %959 = vmatprep.subr.mxu0 0.0
    %960 = vmatpush1.msra.mxu0 0.0
    %961 = vmatprep.subr.mxu0 0.0
    %962 = vmatpush1.msra.mxu0 0.0
    %963 = vmatprep.subr.mxu0 0.0
    %964 = vmatpush1.msra.mxu0 0.0
    %965 = vmatprep.subr.mxu0 0.0
    %966 = vmatpush1.msra.mxu0 0.0
    %967 = vmatprep.subr.mxu0 0.0
    %968 = vmatpush1.msra.mxu0 0.0
    %969 = vmatprep.subr.mxu0 0.0
    %970 = vmatpush1.msra.mxu0 0.0
    %971 = vmatprep.subr.mxu0 0.0
    %972 = vmatpush1.msra.mxu0 0.0
    %973 = vmatprep.subr.mxu0 0.0
    %974 = vmatpush1.msra.mxu0 0.0
    %975 = vmatprep.subr.mxu0 0.0
    %976 = vmatpush1.msra.mxu0 0.0
    %977 = vmatprep.subr.mxu0 0.0
    %978 = vmatpush1.msra.mxu0 0.0
    %979 = vmatprep.subr.mxu0 0.0
    %980 = vmatpush1.msra.mxu0 0.0
    %981 = vmatprep.subr.mxu0 0.0
    %982 = vmatpush1.msra.mxu0 0.0
    %983 = vmatprep.subr.mxu0 0.0
    %984 = vmatpush1.msra.mxu0 0.0
    %985 = vmatprep.subr.mxu0 0.0
    %986 = vmatpush1.msra.mxu0 0.0
    %987 = vmatprep.subr.mxu0 0.0
    %988 = vmatpush1.msra.mxu0 0.0
    %989 = vmatprep.subr.mxu0 0.0
    %990 = vmatpush1.msra.mxu0 0.0
    %991 = vmatprep.subr.mxu0 0.0
    %992 = vmatpush1.msra.mxu0 0.0
    %993 = vmatprep.subr.mxu0 0.0
    %994 = vmatpush1.msra.mxu0 0.0
    %995 = vmatprep.mubr.f32.mxu0 0.0
    %996 = vmatmul.mubr.f32.gmra.mrb[0].mxu0 %v929
    %v997 = vpop.f32.mrb[0].mxu0
    %v998 = vadd.f32 %v200, %v997
    %v999 = vpop.f32.mrb[0].mxu0
    %v1000 = vadd.f32 %v202, %v999
    %1001 = vdwg.mxu0
    %v1002 = vtanh.pop %v998
    %v1003 = vtanh.pop %v1000
    %v1004 = vmul.f32 %v1002, 0.5
    %v1005 = vmul.f32 %v1003, 0.5
    %v1006 = vadd.f32 %v1004, 0.5
    %v1007 = vadd.f32 %v1005, 0.5
    %v1008 = vsel %vm227, %v1002, %v1006
    %v1009 = vsel %vm228, %v1003, %v1007
    %v1010 = vmul.f32 %v1008, %v923
    %v1011 = vmul.f32 %v1008, %v1009
    %1013 = vrot.lane.b32.xlu0 %v1011, 64
    %v1014 = vpop.permute.xlu0 %1013
    %v1016 = vadd.f32 %v1010, %v1014
    %v1017 = vtanh.pop %v1016
    %v1018 = vmul.f32 %v1009, %v1017
    %1021 = vrot.lane.b32.xlu0 %v1018, 64
    %v1022 = vpop.permute.xlu0 %1021
    %vm1024 = vcmask 261120
    %v1025 = vsel %vm1024, %v928, %v1022
    %v1026 = vsel %vm277, %v1025, %v923
    %vm1027 = vcmask 785408
    %v1028 = vsel %vm1027, %v1026, %v1016
    %1029 = vst [vmem:[#allocation5] sm:$0xff] %v1028
    // Predicated region
    $region22: #{tpu_custom_call.1} parent=1 // pred_check
      _
    $region23: #{tpu_custom_call.1} parent=1 // pred_check_branch
      %1031 = sbr.rel (0) target = $region25
    $region24: #{tpu_custom_call.1} parent=1 // pred_region
      %s1033 = ssub.s32 128, 128
      %1034 = vsyncadd [#allocation4], %s1033
      %s1036 = sshll.u32 [#allocation5], 4
      %s1037 = int_to_ptr.vmem [resolvable:$true] %s1036
      %1039 = dma.vmem_to_hbm [thread:$0]  %s1037, 128, %s4, [#allocation4]
    $region25: #{tpu_custom_call.1} parent=1 // pred_fallthru
      _
    // Predicated region
    $region26: #{tpu_custom_call.1} parent=1 // pred_check
      _
    $region27: #{tpu_custom_call.1} parent=1 // pred_check_branch
      %1041 = sbr.rel (0) target = $region29
    $region28: #{tpu_custom_call.1} parent=1 // pred_region
      %1042 = dma.done [#allocation4], 128
    $region29: #{tpu_custom_call.1} parent=1 // pred_fallthru
      _
    %1043 = vsyncpa [#allocation3], 1
    %1044 = vsyncpa [#allocation4], 1

</llo_original>
